<compile_context>
chip_gen: v7x
topology: tpu7x:2x2x1
jax: 0.10.0
libtpu: 0.0.40
codegen_flags: <defaults>
</compile_context>

<pallas_src>
import functools

import jax
import jax.numpy as jnp
from jax.experimental import pallas as pl
from jax.experimental.pallas import tpu as pltpu

LANE = 128


def _round_up(n, m):
    return ((n + m - 1) // m) * m


def _make_dqn_kernel(h1, h2, h3p, outp):
    """Kernel closure with static bias offsets into the packed bias row."""
    o2 = h1                 # end of b1
    o3 = h1 + h2            # end of b2
    o4 = h1 + h2 + h3p      # end of b3

    def kernel(x_ref, w1_ref, w2_ref, w3_ref, w4_ref, b_ref, o_ref):
        # Layer 1: Linear(in, 256) + ReLU   (bf16 MXU matmul, f32 accum/epilogue)
        h = jnp.dot(x_ref[...], w1_ref[...], preferred_element_type=jnp.float32)
        h = jnp.maximum(h + b_ref[:, 0:o2], 0.0)
        # Layer 2: Linear(256, 128) + ReLU
        h = jnp.dot(h.astype(jnp.bfloat16), w2_ref[...],
                    preferred_element_type=jnp.float32)
        h = jnp.maximum(h + b_ref[:, o2:o3], 0.0)
        # Layer 3: Linear(128, 64 -> 128 padded) + ReLU
        h = jnp.dot(h.astype(jnp.bfloat16), w3_ref[...],
                    preferred_element_type=jnp.float32)
        h = jnp.maximum(h + b_ref[:, o3:o4], 0.0)
        # Layer 4: Linear(64 -> 128 padded, out -> 128 padded), no activation
        out = jnp.dot(h.astype(jnp.bfloat16), w4_ref[...],
                      preferred_element_type=jnp.float32)
        o_ref[...] = (out + b_ref[:, o4:o4 + outp]).astype(o_ref.dtype)

    return kernel


@functools.partial(jax.jit, static_argnames=("batch_tile",))
def dqn_forward(x, params, *, batch_tile=256):
    """params = (w1, b1, w2, b2, w3, b3, w4, b4); weights (in, out), biases (1, out)."""
    w1, b1, w2, b2, w3, b3, w4, b4 = params
    batch, in_dim = x.shape
    h1, h2, h3, out_dim = w1.shape[1], w2.shape[1], w3.shape[1], w4.shape[1]

    # lane-dense (128-multiple) padded dims
    inp = _round_up(in_dim, LANE)      # 32  -> 128
    h3p = _round_up(h3, LANE)          # 64  -> 128
    outp = _round_up(out_dim, LANE)    # 8   -> 128

    # batch tiling: tile is a multiple of 128 (good MXU M); pad batch up to it
    tb = min(batch_tile, _round_up(batch, LANE))
    pb = _round_up(batch, tb)
    grid = (pb // tb,)

    def pad2(a, r, c):
        return jnp.pad(a, ((0, r - a.shape[0]), (0, c - a.shape[1])))

    # zero-padded, lane-dense bf16 weights (zero pads keep the math exact)
    w1p = pad2(w1, inp, h1).astype(jnp.bfloat16)
    w2p = pad2(w2, h1, h2).astype(jnp.bfloat16)
    w3p = pad2(w3, h2, h3p).astype(jnp.bfloat16)
    w4p = pad2(w4, h3p, outp).astype(jnp.bfloat16)

    # pack all biases (f32) into one lane-dense row -> a single small DMA
    bpk = jnp.concatenate([
        b1.reshape(1, h1),
        b2.reshape(1, h2),
        pad2(b3.reshape(1, h3), 1, h3p),
        pad2(b4.reshape(1, out_dim), 1, outp),
    ], axis=1)
    bw = h1 + h2 + h3p + outp          # 256 + 128 + 128 + 128 = 640 (5 * 128)

    # padded bf16 activations
    xp = pad2(x, pb, inp).astype(jnp.bfloat16)

    flops = 2 * pb * (inp * h1 + h1 * h2 + h2 * h3p + h3p * outp)
    bytes_accessed = (xp.size * 2 + w1p.size * 2 + w2p.size * 2 + w3p.size * 2
                      + w4p.size * 2 + bpk.size * 4 + pb * outp * 4)

    kernel = _make_dqn_kernel(h1, h2, h3p, outp)
    resident = lambda i: (0, 0)   # same block every grid step -> stays in VMEM

    out_padded = pl.pallas_call(
        kernel,
        out_shape=jax.ShapeDtypeStruct((pb, outp), jnp.float32),
        grid=grid,
        in_specs=[
            pl.BlockSpec((tb, inp), lambda i: (i, 0)),   # x: tiled over batch
            pl.BlockSpec((inp, h1), resident),
            pl.BlockSpec((h1, h2), resident),
            pl.BlockSpec((h2, h3p), resident),
            pl.BlockSpec((h3p, outp), resident),
            pl.BlockSpec((1, bw), resident),
        ],
        out_specs=pl.BlockSpec((tb, outp), lambda i: (i, 0)),
        compiler_params=pltpu.CompilerParams(
            dimension_semantics=("parallel",)),
        cost_estimate=pl.CostEstimate(
            flops=flops, transcendentals=0, bytes_accessed=bytes_accessed),
    )(xp, w1p, w2p, w3p, w4p, bpk)

    return out_padded[:batch, :out_dim]


def init_dqn_params(key, input_dim, output_dim):
    """Deterministic init mimicking nn.Linear's uniform(-1/sqrt(fan_in), 1/sqrt(fan_in))."""
    dims = [input_dim, 256, 128, 64, output_dim]
    params = []
    for i in range(4):
        fan_in, fan_out = dims[i], dims[i + 1]
        key, kw, kb = jax.random.split(key, 3)
        bound = 1.0 / jnp.sqrt(float(fan_in))
        # stored as (in, out) == PyTorch weight (out, in) transposed
        w = jax.random.uniform(kw, (fan_in, fan_out), jnp.float32, -bound, bound)
        b = jax.random.uniform(kb, (1, fan_out), jnp.float32, -bound, bound)
        params += [w, b]
    return tuple(params)


def dqn_reference_f32(x, params):
    w1, b1, w2, b2, w3, b3, w4, b4 = params
    h = jnp.maximum(x @ w1 + b1, 0.0)
    h = jnp.maximum(h @ w2 + b2, 0.0)
    h = jnp.maximum(h @ w3 + b3, 0.0)
    return h @ w4 + b4


def dqn_reference_bf16(x, params):
    """Matches the kernel's precision: bf16 operands, f32 accumulation/epilogue."""
    w1, b1, w2, b2, w3, b3, w4, b4 = params

    def mm(a, w):
        return jax.lax.dot(a.astype(jnp.bfloat16), w.astype(jnp.bfloat16),
                           preferred_element_type=jnp.float32)

    h = jnp.maximum(mm(x, w1) + b1, 0.0)
    h = jnp.maximum(mm(h, w2) + b2, 0.0)
    h = jnp.maximum(mm(h, w3) + b3, 0.0)
    return mm(h, w4) + b4


if __name__ == "__main__":
    key = jax.random.PRNGKey(0)
    batch, input_dim, output_dim = 8, 32, 8

    kx, kp = jax.random.split(key)
    x = jax.random.normal(kx, (batch, input_dim), jnp.float32)
    params = init_dqn_params(kp, input_dim, output_dim)

    out = dqn_forward(x, params)
    out = jax.block_until_ready(out)
    assert out.shape == (batch, output_dim)

    # tight check vs. a precision-matched (bf16 operands, f32 accum) reference
    ref_bf16 = dqn_reference_bf16(x, params)
    assert jnp.allclose(out, ref_bf16, atol=2e-3, rtol=2e-3), "mismatch vs bf16 reference"

    # looser sanity check vs. the full-f32 reference (bf16 rounding tolerance)
    ref_f32 = dqn_reference_f32(x, params)
    assert jnp.allclose(out, ref_f32, atol=1e-1, rtol=1e-1), "mismatch vs f32 reference"

    print("KERNEL_OK")
</pallas_src>

<mosaic_0001>
module attributes {stable_mosaic.version = 11 : i64} {
  func.func @kernel(%arg0: i32, %arg1: memref<128x128xbf16, #tpu.memory_space<vmem>>, %arg2: memref<128x256xbf16, #tpu.memory_space<vmem>>, %arg3: memref<256x128xbf16, #tpu.memory_space<vmem>>, %arg4: memref<128x128xbf16, #tpu.memory_space<vmem>>, %arg5: memref<128x128xbf16, #tpu.memory_space<vmem>>, %arg6: memref<1x640xf32, #tpu.memory_space<vmem>>, %arg7: memref<128x128xf32, #tpu.memory_space<vmem>>) attributes {dimension_semantics = [#tpu.dimension_semantics<parallel>], iteration_bounds = array<i64: 1>, scalar_prefetch = 0 : i64, scratch_operands = 0 : i64, tpu.core_type = #tpu.core_type<tc>, window_params = [{transform_indices = @transform_0, window_bounds = array<i64: 128, 128>}, {pipeline_mode = #tpu.pipeline_mode<synchronous>, transform_indices = @transform_1, window_bounds = array<i64: 128, 256>}, {pipeline_mode = #tpu.pipeline_mode<synchronous>, transform_indices = @transform_2, window_bounds = array<i64: 256, 128>}, {pipeline_mode = #tpu.pipeline_mode<synchronous>, transform_indices = @transform_3, window_bounds = array<i64: 128, 128>}, {pipeline_mode = #tpu.pipeline_mode<synchronous>, transform_indices = @transform_4, window_bounds = array<i64: 128, 128>}, {pipeline_mode = #tpu.pipeline_mode<synchronous>, transform_indices = @transform_5, window_bounds = array<i64: 1, 640>}, {transform_indices = @transform_6, window_bounds = array<i64: 128, 128>}]} {
    %c0 = arith.constant 0 : index
    %c0_0 = arith.constant 0 : index
    %0 = vector.load %arg1[%c0, %c0_0] : memref<128x128xbf16, #tpu.memory_space<vmem>>, vector<128x128xbf16>
    %c0_1 = arith.constant 0 : index
    %c0_2 = arith.constant 0 : index
    %1 = vector.load %arg2[%c0_1, %c0_2] : memref<128x256xbf16, #tpu.memory_space<vmem>>, vector<128x256xbf16>
    %cst = arith.constant dense<0.000000e+00> : vector<128x256xf32>
    %2 = tpu.matmul %0, %1, %cst {dimension_numbers = #tpu.dot_dimension_numbers<[1], [0], [0], [1], [0, 0, 1, 1], [], []>} : vector<128x128xbf16>, vector<128x256xbf16>, vector<128x256xf32> -> vector<128x256xf32>
    %c0_3 = arith.constant 0 : index
    %c0_4 = arith.constant 0 : index
    %3 = vector.load %arg6[%c0_3, %c0_4] : memref<1x640xf32, #tpu.memory_space<vmem>>, vector<1x256xf32>
    %4 = vector.broadcast %3 : vector<1x256xf32> to vector<128x256xf32>
    %5 = arith.addf %2, %4 : vector<128x256xf32>
    %cst_5 = arith.constant 0.000000e+00 : f32
    %6 = vector.broadcast %cst_5 : f32 to vector<128x256xf32>
    %7 = arith.maximumf %5, %6 : vector<128x256xf32>
    %8 = arith.truncf %7 : vector<128x256xf32> to vector<128x256xbf16>
    %c0_6 = arith.constant 0 : index
    %c0_7 = arith.constant 0 : index
    %9 = vector.load %arg3[%c0_6, %c0_7] : memref<256x128xbf16, #tpu.memory_space<vmem>>, vector<256x128xbf16>
    %cst_8 = arith.constant dense<0.000000e+00> : vector<128x128xf32>
    %10 = tpu.matmul %8, %9, %cst_8 {dimension_numbers = #tpu.dot_dimension_numbers<[1], [0], [0], [1], [0, 0, 1, 1], [], []>} : vector<128x256xbf16>, vector<256x128xbf16>, vector<128x128xf32> -> vector<128x128xf32>
    %c0_9 = arith.constant 0 : index
    %c256 = arith.constant 256 : index
    %11 = vector.load %arg6[%c0_9, %c256] : memref<1x640xf32, #tpu.memory_space<vmem>>, vector<1x128xf32>
    %12 = vector.broadcast %11 : vector<1x128xf32> to vector<128x128xf32>
    %13 = arith.addf %10, %12 : vector<128x128xf32>
    %cst_10 = arith.constant 0.000000e+00 : f32
    %14 = vector.broadcast %cst_10 : f32 to vector<128x128xf32>
    %15 = arith.maximumf %13, %14 : vector<128x128xf32>
    %16 = arith.truncf %15 : vector<128x128xf32> to vector<128x128xbf16>
    %c0_11 = arith.constant 0 : index
    %c0_12 = arith.constant 0 : index
    %17 = vector.load %arg4[%c0_11, %c0_12] : memref<128x128xbf16, #tpu.memory_space<vmem>>, vector<128x128xbf16>
    %cst_13 = arith.constant dense<0.000000e+00> : vector<128x128xf32>
    %18 = tpu.matmul %16, %17, %cst_13 {dimension_numbers = #tpu.dot_dimension_numbers<[1], [0], [0], [1], [0, 0, 1, 1], [], []>} : vector<128x128xbf16>, vector<128x128xbf16>, vector<128x128xf32> -> vector<128x128xf32>
    %c0_14 = arith.constant 0 : index
    %c384 = arith.constant 384 : index
    %19 = vector.load %arg6[%c0_14, %c384] : memref<1x640xf32, #tpu.memory_space<vmem>>, vector<1x128xf32>
    %20 = vector.broadcast %19 : vector<1x128xf32> to vector<128x128xf32>
    %21 = arith.addf %18, %20 : vector<128x128xf32>
    %cst_15 = arith.constant 0.000000e+00 : f32
    %22 = vector.broadcast %cst_15 : f32 to vector<128x128xf32>
    %23 = arith.maximumf %21, %22 : vector<128x128xf32>
    %24 = arith.truncf %23 : vector<128x128xf32> to vector<128x128xbf16>
    %c0_16 = arith.constant 0 : index
    %c0_17 = arith.constant 0 : index
    %25 = vector.load %arg5[%c0_16, %c0_17] : memref<128x128xbf16, #tpu.memory_space<vmem>>, vector<128x128xbf16>
    %cst_18 = arith.constant dense<0.000000e+00> : vector<128x128xf32>
    %26 = tpu.matmul %24, %25, %cst_18 {dimension_numbers = #tpu.dot_dimension_numbers<[1], [0], [0], [1], [0, 0, 1, 1], [], []>} : vector<128x128xbf16>, vector<128x128xbf16>, vector<128x128xf32> -> vector<128x128xf32>
    %c0_19 = arith.constant 0 : index
    %c512 = arith.constant 512 : index
    %27 = vector.load %arg6[%c0_19, %c512] : memref<1x640xf32, #tpu.memory_space<vmem>>, vector<1x128xf32>
    %28 = vector.broadcast %27 : vector<1x128xf32> to vector<128x128xf32>
    %29 = arith.addf %26, %28 : vector<128x128xf32>
    %c0_20 = arith.constant 0 : index
    %c0_21 = arith.constant 0 : index
    %30 = vector.load %arg7[%c0_20, %c0_21] : memref<128x128xf32, #tpu.memory_space<vmem>>, vector<128x128xf32>
    tpu.vector_store %arg7[%c0_20, %c0_21], %29 {strides = array<i32>} : memref<128x128xf32, #tpu.memory_space<vmem>>, vector<128x128xf32>,
    return
  }
  func.func @transform_0(%arg0: i32) -> (i32, i32) {
    %c0_i32 = arith.constant 0 : i32
    %c0_i32_0 = arith.constant 0 : i32
    return %arg0, %c0_i32 : i32, i32
  }
  func.func @transform_1(%arg0: i32) -> (i32, i32) {
    %c0_i32 = arith.constant 0 : i32
    %c0_i32_0 = arith.constant 0 : i32
    %c0_i32_1 = arith.constant 0 : i32
    return %c0_i32, %c0_i32_0 : i32, i32
  }
  func.func @transform_2(%arg0: i32) -> (i32, i32) {
    %c0_i32 = arith.constant 0 : i32
    %c0_i32_0 = arith.constant 0 : i32
    %c0_i32_1 = arith.constant 0 : i32
    return %c0_i32, %c0_i32_0 : i32, i32
  }
  func.func @transform_3(%arg0: i32) -> (i32, i32) {
    %c0_i32 = arith.constant 0 : i32
    %c0_i32_0 = arith.constant 0 : i32
    %c0_i32_1 = arith.constant 0 : i32
    return %c0_i32, %c0_i32_0 : i32, i32
  }
  func.func @transform_4(%arg0: i32) -> (i32, i32) {
    %c0_i32 = arith.constant 0 : i32
    %c0_i32_0 = arith.constant 0 : i32
    %c0_i32_1 = arith.constant 0 : i32
    return %c0_i32, %c0_i32_0 : i32, i32
  }
  func.func @transform_5(%arg0: i32) -> (i32, i32) {
    %c0_i32 = arith.constant 0 : i32
    %c0_i32_0 = arith.constant 0 : i32
    %c0_i32_1 = arith.constant 0 : i32
    return %c0_i32, %c0_i32_0 : i32, i32
  }
  func.func @transform_6(%arg0: i32) -> (i32, i32) {
    %c0_i32 = arith.constant 0 : i32
    %c0_i32_0 = arith.constant 0 : i32
    return %arg0, %c0_i32 : i32, i32
  }
}

</mosaic_0001>

<llo_original>
// kernel: dqn_forward.1
$region0: #{dqn_forward.1}
  #allocation0 [shape = 'u32[]', space=smem, size = 0x4, offset = 0x4, fixed_abs, tag = 'smem constant byte address 0x4 - core index']
  #allocation1 [shape = 'u32[144,128]{1,0:T(1,128)}', space=vmem, size = 0x12000, scoped, tag = 'internal scratch']
  %s0 = inlined_call_operand.vmem [shape: bf16[128,128], index: 0, kind: input, shape index: {}]
  %s1 = inlined_call_operand.vmem [shape: bf16[128,256], index: 1, kind: input, shape index: {}]
  %s2 = inlined_call_operand.vmem [shape: bf16[256,128], index: 2, kind: input, shape index: {}]
  %s3 = inlined_call_operand.vmem [shape: bf16[128,128], index: 3, kind: input, shape index: {}]
  %s4 = inlined_call_operand.vmem [shape: bf16[128,128], index: 4, kind: input, shape index: {}]
  %s5 = inlined_call_operand.vmem [shape: f32[1,640], index: 5, kind: input, shape index: {}]
  %s6 = inlined_call_operand.vmem [shape: f32[128,128], index: 6, kind: output, shape index: {}]
  %s7 = sld [smem:[#allocation0]]
  $region34: #{dqn_forward.1} parent=0
    _
  %s9 = ssub.s32 1, %s7
  %s10 = scalar_select 0, %s9, %s7
  // Predicated region
  $region2: #{dqn_forward.1} parent=0 // pred_check
    _
  $region3: #{dqn_forward.1} parent=0 // pred_check_branch
    %12 = sbr.rel (0) target = $region5
  $region4: #{dqn_forward.1} parent=0 // pred_region
    _
  $region5: #{dqn_forward.1} parent=0 // pred_fallthru
    _
  // Predicated region
  $region6: #{dqn_forward.1} parent=0 // pred_check
    _
  $region7: #{dqn_forward.1} parent=0 // pred_check_branch
    %14 = sbr.rel (0) target = $region9
  $region8: #{dqn_forward.1} parent=0 // pred_region
    _
  $region9: #{dqn_forward.1} parent=0 // pred_fallthru
    _
  // Predicated region
  $region10: #{dqn_forward.1} parent=0 // pred_check
    _
  $region11: #{dqn_forward.1} parent=0 // pred_check_branch
    %16 = sbr.rel (0) target = $region13
  $region12: #{dqn_forward.1} parent=0 // pred_region
    _
  $region13: #{dqn_forward.1} parent=0 // pred_fallthru
    _
  // Predicated region
  $region14: #{dqn_forward.1} parent=0 // pred_check
    _
  $region15: #{dqn_forward.1} parent=0 // pred_check_branch
    %18 = sbr.rel (0) target = $region17
  $region16: #{dqn_forward.1} parent=0 // pred_region
    _
  $region17: #{dqn_forward.1} parent=0 // pred_fallthru
    _
  // Predicated region
  $region18: #{dqn_forward.1} parent=0 // pred_check
    _
  $region19: #{dqn_forward.1} parent=0 // pred_check_branch
    %20 = sbr.rel (0) target = $region21
  $region20: #{dqn_forward.1} parent=0 // pred_region
    _
  $region21: #{dqn_forward.1} parent=0 // pred_fallthru
    _
  // Predicated region
  $region22: #{dqn_forward.1} parent=0 // pred_check
    _
  $region23: #{dqn_forward.1} parent=0 // pred_check_branch
    %22 = sbr.rel (0) target = $region25
  $region24: #{dqn_forward.1} parent=0 // pred_region
    _
  $region25: #{dqn_forward.1} parent=0 // pred_fallthru
    _
  %v24 = vld [vmem:[%s0] sm:$0xf]
  %v25 = vld [vmem:[%s0 + $0x4] sm:$0xf]
  %v26 = vld [vmem:[%s0 + $0x8] sm:$0xf]
  %v27 = vld [vmem:[%s0 + $0xc] sm:$0xf]
  %v28 = vld [vmem:[%s0 + $0x10] sm:$0xf]
  %v29 = vld [vmem:[%s0 + $0x14] sm:$0xf]
  %v30 = vld [vmem:[%s0 + $0x18] sm:$0xf]
  %v31 = vld [vmem:[%s0 + $0x1c] sm:$0xf]
  %v32 = vld [vmem:[%s0 + $0x20] sm:$0xf]
  %v33 = vld [vmem:[%s0 + $0x24] sm:$0xf]
  %v34 = vld [vmem:[%s0 + $0x28] sm:$0xf]
  %v35 = vld [vmem:[%s0 + $0x2c] sm:$0xf]
  %v36 = vld [vmem:[%s0 + $0x30] sm:$0xf]
  %v37 = vld [vmem:[%s0 + $0x34] sm:$0xf]
  %v38 = vld [vmem:[%s0 + $0x38] sm:$0xf]
  %v39 = vld [vmem:[%s0 + $0x3c] sm:$0xf]
  %v40 = vld [vmem:[%s1] sm:$0xff]
  %v41 = vld [vmem:[%s1 + $0x8] sm:$0xff]
  %v42 = vld [vmem:[%s1 + $0x10] sm:$0xff]
  %v43 = vld [vmem:[%s1 + $0x18] sm:$0xff]
  %v44 = vld [vmem:[%s1 + $0x20] sm:$0xff]
  %v45 = vld [vmem:[%s1 + $0x28] sm:$0xff]
  %v46 = vld [vmem:[%s1 + $0x30] sm:$0xff]
  %v47 = vld [vmem:[%s1 + $0x38] sm:$0xff]
  %v48 = vld [vmem:[%s1 + $0x40] sm:$0xff]
  %v49 = vld [vmem:[%s1 + $0x48] sm:$0xff]
  %v50 = vld [vmem:[%s1 + $0x50] sm:$0xff]
  %v51 = vld [vmem:[%s1 + $0x58] sm:$0xff]
  %v52 = vld [vmem:[%s1 + $0x60] sm:$0xff]
  %v53 = vld [vmem:[%s1 + $0x68] sm:$0xff]
  %v54 = vld [vmem:[%s1 + $0x70] sm:$0xff]
  %v55 = vld [vmem:[%s1 + $0x78] sm:$0xff]
  %v56 = vld [vmem:[%s5] sm:$0x3]
  %v58 = vlaneseq
  %v59 = vshrl.u32 %v58, 7
  %v60 = vsub.s32 0, %v59
  %v61 = vrot.slane %v56, %v60
  %v62 = vlaneseq
  %v63 = vshrl.u32 %v62, 7
  %v64 = vsub.s32 1, %v63
  %v65 = vrot.slane %v56, %v64
  %v84 = vunpack.c.l.b16 %v24
  %v85 = vunpack.c.l.b16 %v25
  %v86 = vunpack.c.l.b16 %v26
  %v87 = vunpack.c.l.b16 %v27
  %v88 = vunpack.c.l.b16 %v28
  %v89 = vunpack.c.l.b16 %v29
  %v90 = vunpack.c.l.b16 %v30
  %v91 = vunpack.c.l.b16 %v31
  %v92 = vunpack.c.l.b16 %v32
  %v93 = vunpack.c.l.b16 %v33
  %v94 = vunpack.c.l.b16 %v34
  %v95 = vunpack.c.l.b16 %v35
  %v96 = vunpack.c.l.b16 %v36
  %v97 = vunpack.c.l.b16 %v37
  %v98 = vunpack.c.l.b16 %v38
  %v99 = vunpack.c.l.b16 %v39
  %v100 = vpack.c.b16 %v85, %v84
  %v101 = vpack.c.b16 %v87, %v86
  %v102 = vpack.c.b16 %v89, %v88
  %v103 = vpack.c.b16 %v91, %v90
  %v104 = vpack.c.b16 %v93, %v92
  %v105 = vpack.c.b16 %v95, %v94
  %v106 = vpack.c.b16 %v97, %v96
  %v107 = vpack.c.b16 %v99, %v98
  %v132 = vunpack.c.l.b16 %v40
  %v133 = vunpack.c.h.b16 %v40
  %v134 = vunpack.c.l.b16 %v41
  %v135 = vunpack.c.h.b16 %v41
  %v136 = vunpack.c.l.b16 %v42
  %v137 = vunpack.c.h.b16 %v42
  %v138 = vunpack.c.l.b16 %v43
  %v139 = vunpack.c.h.b16 %v43
  %v140 = vunpack.c.l.b16 %v44
  %v141 = vunpack.c.h.b16 %v44
  %v142 = vunpack.c.l.b16 %v45
  %v143 = vunpack.c.h.b16 %v45
  %v144 = vunpack.c.l.b16 %v46
  %v145 = vunpack.c.h.b16 %v46
  %v146 = vunpack.c.l.b16 %v47
  %v147 = vunpack.c.h.b16 %v47
  %v148 = vunpack.c.l.b16 %v48
  %v149 = vunpack.c.h.b16 %v48
  %v150 = vunpack.c.l.b16 %v49
  %v151 = vunpack.c.h.b16 %v49
  %v152 = vunpack.c.l.b16 %v50
  %v153 = vunpack.c.h.b16 %v50
  %v154 = vunpack.c.l.b16 %v51
  %v155 = vunpack.c.h.b16 %v51
  %v156 = vunpack.c.l.b16 %v52
  %v157 = vunpack.c.h.b16 %v52
  %v158 = vunpack.c.l.b16 %v53
  %v159 = vunpack.c.h.b16 %v53
  %v160 = vunpack.c.l.b16 %v54
  %v161 = vunpack.c.h.b16 %v54
  %v162 = vunpack.c.l.b16 %v55
  %v163 = vunpack.c.h.b16 %v55
  %v164 = vpack.c.b16 %v134, %v132
  %v165 = vpack.c.b16 %v135, %v133
  %v166 = vpack.c.b16 %v138, %v136
  %v167 = vpack.c.b16 %v139, %v137
  %v168 = vpack.c.b16 %v142, %v140
  %v169 = vpack.c.b16 %v143, %v141
  %v170 = vpack.c.b16 %v146, %v144
  %v171 = vpack.c.b16 %v147, %v145
  %v172 = vpack.c.b16 %v150, %v148
  %v173 = vpack.c.b16 %v151, %v149
  %v174 = vpack.c.b16 %v154, %v152
  %v175 = vpack.c.b16 %v155, %v153
  %v176 = vpack.c.b16 %v158, %v156
  %v177 = vpack.c.b16 %v159, %v157
  %v178 = vpack.c.b16 %v162, %v160
  %v179 = vpack.c.b16 %v163, %v161
  %196 = vmatprep.subr.bf16.mxu0 %v165
  %197 = vmatpush1.bf16.msra.mxu0 %v164
  %198 = vmatprep.subr.bf16.mxu0 %v167
  %199 = vmatpush1.bf16.msra.mxu0 %v166
  %200 = vmatprep.subr.bf16.mxu0 %v169
  %201 = vmatpush1.bf16.msra.mxu0 %v168
  %202 = vmatprep.subr.bf16.mxu0 %v171
  %203 = vmatpush1.bf16.msra.mxu0 %v170
  %204 = vmatprep.subr.bf16.mxu0 %v173
  %205 = vmatpush1.bf16.msra.mxu0 %v172
  %206 = vmatprep.subr.bf16.mxu0 %v175
  %207 = vmatpush1.bf16.msra.mxu0 %v174
  %208 = vmatprep.subr.bf16.mxu0 %v177
  %209 = vmatpush1.bf16.msra.mxu0 %v176
  %210 = vmatprep.subr.bf16.mxu0 %v179
  %211 = vmatpush1.bf16.msra.mxu0 %v178
  %212 = vmatprep.subr.bf16.mxu0 0
  %213 = vmatpush1.bf16.msra.mxu0 0
  %214 = vmatprep.subr.bf16.mxu0 0
  %215 = vmatpush1.bf16.msra.mxu0 0
  %216 = vmatprep.subr.bf16.mxu0 0
  %217 = vmatpush1.bf16.msra.mxu0 0
  %218 = vmatprep.subr.bf16.mxu0 0
  %219 = vmatpush1.bf16.msra.mxu0 0
  %220 = vmatprep.subr.bf16.mxu0 0
  %221 = vmatpush1.bf16.msra.mxu0 0
  %222 = vmatprep.subr.bf16.mxu0 0
  %223 = vmatpush1.bf16.msra.mxu0 0
  %224 = vmatprep.subr.bf16.mxu0 0
  %225 = vmatpush1.bf16.msra.mxu0 0
  %226 = vmatprep.subr.bf16.mxu0 0
  %227 = vmatpush1.bf16.msra.mxu0 0
  %228 = vmatprep.mubr.bf16.mxu0 0
  %229 = vmatmul.mubr.bf16.gmra.mrb[0].mxu0 %v100
  %v230 = vpop.f32.mrb[0].mxu0
  %v231 = vadd.f32 %v61, %v230
  %v232 = vpop.f32.mrb[0].mxu0
  %v233 = vadd.f32 %v65, %v232
  %v234 = vpop.f32.mrb[0].mxu0
  %v235 = vadd.f32 %v61, %v234
  %v236 = vpop.f32.mrb[0].mxu0
  %v237 = vadd.f32 %v65, %v236
  %238 = vmatprep.mubr.bf16.mxu0 0
  %239 = vmatmul.mubr.bf16.gmra.mrb[0].mxu0 %v101
  %v240 = vpop.f32.mrb[0].mxu0
  %v241 = vadd.f32 %v61, %v240
  %v242 = vpop.f32.mrb[0].mxu0
  %v243 = vadd.f32 %v65, %v242
  %v244 = vpop.f32.mrb[0].mxu0
  %v245 = vadd.f32 %v61, %v244
  %v246 = vpop.f32.mrb[0].mxu0
  %v247 = vadd.f32 %v65, %v246
  %248 = vmatprep.mubr.bf16.mxu0 0
  %249 = vmatmul.mubr.bf16.gmra.mrb[0].mxu0 %v102
  %v250 = vpop.f32.mrb[0].mxu0
  %v251 = vadd.f32 %v61, %v250
  %v252 = vpop.f32.mrb[0].mxu0
  %v253 = vadd.f32 %v65, %v252
  %v254 = vpop.f32.mrb[0].mxu0
  %v255 = vadd.f32 %v61, %v254
  %v256 = vpop.f32.mrb[0].mxu0
  %v257 = vadd.f32 %v65, %v256
  %258 = vmatprep.mubr.bf16.mxu0 0
  %259 = vmatmul.mubr.bf16.gmra.mrb[0].mxu0 %v103
  %v260 = vpop.f32.mrb[0].mxu0
  %v261 = vadd.f32 %v61, %v260
  %v262 = vpop.f32.mrb[0].mxu0
  %v263 = vadd.f32 %v65, %v262
  %v264 = vpop.f32.mrb[0].mxu0
  %v265 = vadd.f32 %v61, %v264
  %v266 = vpop.f32.mrb[0].mxu0
  %v267 = vadd.f32 %v65, %v266
  %268 = vmatprep.mubr.bf16.mxu0 0
  %269 = vmatmul.mubr.bf16.gmra.mrb[0].mxu0 %v104
  %v270 = vpop.f32.mrb[0].mxu0
  %v271 = vadd.f32 %v61, %v270
  %v272 = vpop.f32.mrb[0].mxu0
  %v273 = vadd.f32 %v65, %v272
  %v274 = vpop.f32.mrb[0].mxu0
  %v275 = vadd.f32 %v61, %v274
  %v276 = vpop.f32.mrb[0].mxu0
  %v277 = vadd.f32 %v65, %v276
  %278 = vmatprep.mubr.bf16.mxu0 0
  %279 = vmatmul.mubr.bf16.gmra.mrb[0].mxu0 %v105
  %v280 = vpop.f32.mrb[0].mxu0
  %v281 = vadd.f32 %v61, %v280
  %v282 = vpop.f32.mrb[0].mxu0
  %v283 = vadd.f32 %v65, %v282
  %v284 = vpop.f32.mrb[0].mxu0
  %v285 = vadd.f32 %v61, %v284
  %v286 = vpop.f32.mrb[0].mxu0
  %v287 = vadd.f32 %v65, %v286
  %288 = vmatprep.mubr.bf16.mxu0 0
  %289 = vmatmul.mubr.bf16.gmra.mrb[0].mxu0 %v106
  %v290 = vpop.f32.mrb[0].mxu0
  %v291 = vadd.f32 %v61, %v290
  %v292 = vpop.f32.mrb[0].mxu0
  %v293 = vadd.f32 %v65, %v292
  %v294 = vpop.f32.mrb[0].mxu0
  %v295 = vadd.f32 %v61, %v294
  %v296 = vpop.f32.mrb[0].mxu0
  %v297 = vadd.f32 %v65, %v296
  %298 = vmatprep.mubr.bf16.mxu0 0
  %299 = vmatmul.mubr.bf16.gmra.mrb[0].mxu0 %v107
  %v300 = vpop.f32.mrb[0].mxu0
  %v301 = vadd.f32 %v61, %v300
  %v302 = vpop.f32.mrb[0].mxu0
  %v303 = vadd.f32 %v65, %v302
  %v304 = vpop.f32.mrb[0].mxu0
  %v305 = vadd.f32 %v61, %v304
  %v306 = vpop.f32.mrb[0].mxu0
  %v307 = vadd.f32 %v65, %v306
  %308 = vdwg.mxu0
  %v309 = vmax.f32 %v231, 0.0
  %v310 = vmax.f32 %v233, 0.0
  %v311 = vmax.f32 %v235, 0.0
  %v312 = vmax.f32 %v237, 0.0
  %v313 = vmax.f32 %v241, 0.0
  %v314 = vmax.f32 %v243, 0.0
  %v315 = vmax.f32 %v245, 0.0
  %v316 = vmax.f32 %v247, 0.0
  %v317 = vmax.f32 %v251, 0.0
  %v318 = vmax.f32 %v253, 0.0
  %v319 = vmax.f32 %v255, 0.0
  %v320 = vmax.f32 %v257, 0.0
  %v321 = vmax.f32 %v261, 0.0
  %v322 = vmax.f32 %v263, 0.0
  %v323 = vmax.f32 %v265, 0.0
  %v324 = vmax.f32 %v267, 0.0
  %v325 = vmax.f32 %v271, 0.0
  %v326 = vmax.f32 %v273, 0.0
  %v327 = vmax.f32 %v275, 0.0
  %v328 = vmax.f32 %v277, 0.0
  %v329 = vmax.f32 %v281, 0.0
  %v330 = vmax.f32 %v283, 0.0
  %v331 = vmax.f32 %v285, 0.0
  %v332 = vmax.f32 %v287, 0.0
  %v333 = vmax.f32 %v291, 0.0
  %v334 = vmax.f32 %v293, 0.0
  %v335 = vmax.f32 %v295, 0.0
  %v336 = vmax.f32 %v297, 0.0
  %v337 = vmax.f32 %v301, 0.0
  %v338 = vmax.f32 %v303, 0.0
  %v339 = vmax.f32 %v305, 0.0
  %v340 = vmax.f32 %v307, 0.0
  %v341 = vpack.c.bf16 %v311, %v309
  %v342 = vpack.c.bf16 %v312, %v310
  %v343 = vpack.c.bf16 %v315, %v313
  %v344 = vpack.c.bf16 %v316, %v314
  %v345 = vpack.c.bf16 %v319, %v317
  %v346 = vpack.c.bf16 %v320, %v318
  %v347 = vpack.c.bf16 %v323, %v321
  %v348 = vpack.c.bf16 %v324, %v322
  %v349 = vpack.c.bf16 %v327, %v325
  %v350 = vpack.c.bf16 %v328, %v326
  %v351 = vpack.c.bf16 %v331, %v329
  %v352 = vpack.c.bf16 %v332, %v330
  %v353 = vpack.c.bf16 %v335, %v333
  %v354 = vpack.c.bf16 %v336, %v334
  %v355 = vpack.c.bf16 %v339, %v337
  %v356 = vpack.c.bf16 %v340, %v338
  %v357 = vld [vmem:[%s2] sm:$0xf]
  %v358 = vld [vmem:[%s2 + $0x4] sm:$0xf]
  %v359 = vld [vmem:[%s2 + $0x8] sm:$0xf]
  %v360 = vld [vmem:[%s2 + $0xc] sm:$0xf]
  %v361 = vld [vmem:[%s2 + $0x10] sm:$0xf]
  %v362 = vld [vmem:[%s2 + $0x14] sm:$0xf]
  %v363 = vld [vmem:[%s2 + $0x18] sm:$0xf]
  %v364 = vld [vmem:[%s2 + $0x1c] sm:$0xf]
  %v365 = vld [vmem:[%s2 + $0x20] sm:$0xf]
  %v366 = vld [vmem:[%s2 + $0x24] sm:$0xf]
  %v367 = vld [vmem:[%s2 + $0x28] sm:$0xf]
  %v368 = vld [vmem:[%s2 + $0x2c] sm:$0xf]
  %v369 = vld [vmem:[%s2 + $0x30] sm:$0xf]
  %v370 = vld [vmem:[%s2 + $0x34] sm:$0xf]
  %v371 = vld [vmem:[%s2 + $0x38] sm:$0xf]
  %v372 = vld [vmem:[%s2 + $0x3c] sm:$0xf]
  %v373 = vld [vmem:[%s2 + $0x40] sm:$0xf]
  %v374 = vld [vmem:[%s2 + $0x44] sm:$0xf]
  %v375 = vld [vmem:[%s2 + $0x48] sm:$0xf]
  %v376 = vld [vmem:[%s2 + $0x4c] sm:$0xf]
  %v377 = vld [vmem:[%s2 + $0x50] sm:$0xf]
  %v378 = vld [vmem:[%s2 + $0x54] sm:$0xf]
  %v379 = vld [vmem:[%s2 + $0x58] sm:$0xf]
  %v380 = vld [vmem:[%s2 + $0x5c] sm:$0xf]
  %v381 = vld [vmem:[%s2 + $0x60] sm:$0xf]
  %v382 = vld [vmem:[%s2 + $0x64] sm:$0xf]
  %v383 = vld [vmem:[%s2 + $0x68] sm:$0xf]
  %v384 = vld [vmem:[%s2 + $0x6c] sm:$0xf]
  %v385 = vld [vmem:[%s2 + $0x70] sm:$0xf]
  %v386 = vld [vmem:[%s2 + $0x74] sm:$0xf]
  %v387 = vld [vmem:[%s2 + $0x78] sm:$0xf]
  %v388 = vld [vmem:[%s2 + $0x7c] sm:$0xf]
  %v389 = vld [vmem:[%s5 + $0x2] sm:$0x1]
  %v391 = vlaneseq
  %v392 = vshrl.u32 %v391, 7
  %v393 = vsub.s32 0, %v392
  %v394 = vrot.slane %v389, %v393
  %v428 = vunpack.c.l.b16 %v357
  %v429 = vunpack.c.l.b16 %v358
  %v430 = vunpack.c.l.b16 %v359
  %v431 = vunpack.c.l.b16 %v360
  %v432 = vunpack.c.l.b16 %v361
  %v433 = vunpack.c.l.b16 %v362
  %v434 = vunpack.c.l.b16 %v363
  %v435 = vunpack.c.l.b16 %v364
  %v436 = vunpack.c.l.b16 %v365
  %v437 = vunpack.c.l.b16 %v366
  %v438 = vunpack.c.l.b16 %v367
  %v439 = vunpack.c.l.b16 %v368
  %v440 = vunpack.c.l.b16 %v369
  %v441 = vunpack.c.l.b16 %v370
  %v442 = vunpack.c.l.b16 %v371
  %v443 = vunpack.c.l.b16 %v372
  %v444 = vunpack.c.l.b16 %v373
  %v445 = vunpack.c.l.b16 %v374
  %v446 = vunpack.c.l.b16 %v375
  %v447 = vunpack.c.l.b16 %v376
  %v448 = vunpack.c.l.b16 %v377
  %v449 = vunpack.c.l.b16 %v378
  %v450 = vunpack.c.l.b16 %v379
  %v451 = vunpack.c.l.b16 %v380
  %v452 = vunpack.c.l.b16 %v381
  %v453 = vunpack.c.l.b16 %v382
  %v454 = vunpack.c.l.b16 %v383
  %v455 = vunpack.c.l.b16 %v384
  %v456 = vunpack.c.l.b16 %v385
  %v457 = vunpack.c.l.b16 %v386
  %v458 = vunpack.c.l.b16 %v387
  %v459 = vunpack.c.l.b16 %v388
  %v460 = vpack.c.b16 %v429, %v428
  %v461 = vpack.c.b16 %v431, %v430
  %v462 = vpack.c.b16 %v433, %v432
  %v463 = vpack.c.b16 %v435, %v434
  %v464 = vpack.c.b16 %v437, %v436
  %v465 = vpack.c.b16 %v439, %v438
  %v466 = vpack.c.b16 %v441, %v440
  %v467 = vpack.c.b16 %v443, %v442
  %v468 = vpack.c.b16 %v445, %v444
  %v469 = vpack.c.b16 %v447, %v446
  %v470 = vpack.c.b16 %v449, %v448
  %v471 = vpack.c.b16 %v451, %v450
  %v472 = vpack.c.b16 %v453, %v452
  %v473 = vpack.c.b16 %v455, %v454
  %v474 = vpack.c.b16 %v457, %v456
  %v475 = vpack.c.b16 %v459, %v458
  %492 = vmatprep.subr.bf16.mxu0 0
  %493 = vmatpush1.bf16.msra.mxu0 %v460
  %494 = vmatprep.subr.bf16.mxu0 0
  %495 = vmatpush1.bf16.msra.mxu0 %v461
  %496 = vmatprep.subr.bf16.mxu0 0
  %497 = vmatpush1.bf16.msra.mxu0 %v462
  %498 = vmatprep.subr.bf16.mxu0 0
  %499 = vmatpush1.bf16.msra.mxu0 %v463
  %500 = vmatprep.subr.bf16.mxu0 0
  %501 = vmatpush1.bf16.msra.mxu0 %v464
  %502 = vmatprep.subr.bf16.mxu0 0
  %503 = vmatpush1.bf16.msra.mxu0 %v465
  %504 = vmatprep.subr.bf16.mxu0 0
  %505 = vmatpush1.bf16.msra.mxu0 %v466
  %506 = vmatprep.subr.bf16.mxu0 0
  %507 = vmatpush1.bf16.msra.mxu0 %v467
  %508 = vmatprep.subr.bf16.mxu0 0
  %509 = vmatpush1.bf16.msra.mxu0 %v468
  %510 = vmatprep.subr.bf16.mxu0 0
  %511 = vmatpush1.bf16.msra.mxu0 %v469
  %512 = vmatprep.subr.bf16.mxu0 0
  %513 = vmatpush1.bf16.msra.mxu0 %v470
  %514 = vmatprep.subr.bf16.mxu0 0
  %515 = vmatpush1.bf16.msra.mxu0 %v471
  %516 = vmatprep.subr.bf16.mxu0 0
  %517 = vmatpush1.bf16.msra.mxu0 %v472
  %518 = vmatprep.subr.bf16.mxu0 0
  %519 = vmatpush1.bf16.msra.mxu0 %v473
  %520 = vmatprep.subr.bf16.mxu0 0
  %521 = vmatpush1.bf16.msra.mxu0 %v474
  %522 = vmatprep.subr.bf16.mxu0 0
  %523 = vmatpush1.bf16.msra.mxu0 %v475
  %524 = vmatprep.mubr.bf16.mxu0 %v342
  %525 = vmatmul.mubr.bf16.gmra.mrb[0].mxu0 %v341
  %v526 = vpop.f32.mrb[0].mxu0
  %v527 = vadd.f32 %v394, %v526
  %v528 = vpop.f32.mrb[0].mxu0
  %v529 = vpop.f32.mrb[0].mxu0
  %v530 = vadd.f32 %v394, %v529
  %v531 = vpop.f32.mrb[0].mxu0
  %532 = vmatprep.mubr.bf16.mxu0 %v344
  %533 = vmatmul.mubr.bf16.gmra.mrb[0].mxu0 %v343
  %v534 = vpop.f32.mrb[0].mxu0
  %v535 = vadd.f32 %v394, %v534
  %v536 = vpop.f32.mrb[0].mxu0
  %v537 = vpop.f32.mrb[0].mxu0
  %v538 = vadd.f32 %v394, %v537
  %v539 = vpop.f32.mrb[0].mxu0
  %540 = vmatprep.mubr.bf16.mxu0 %v346
  %541 = vmatmul.mubr.bf16.gmra.mrb[0].mxu0 %v345
  %v542 = vpop.f32.mrb[0].mxu0
  %v543 = vadd.f32 %v394, %v542
  %v544 = vpop.f32.mrb[0].mxu0
  %v545 = vpop.f32.mrb[0].mxu0
  %v546 = vadd.f32 %v394, %v545
  %v547 = vpop.f32.mrb[0].mxu0
  %548 = vmatprep.mubr.bf16.mxu0 %v348
  %549 = vmatmul.mubr.bf16.gmra.mrb[0].mxu0 %v347
  %v550 = vpop.f32.mrb[0].mxu0
  %v551 = vadd.f32 %v394, %v550
  %v552 = vpop.f32.mrb[0].mxu0
  %v553 = vpop.f32.mrb[0].mxu0
  %v554 = vadd.f32 %v394, %v553
  %v555 = vpop.f32.mrb[0].mxu0
  %556 = vmatprep.mubr.bf16.mxu0 %v350
  %557 = vmatmul.mubr.bf16.gmra.mrb[0].mxu0 %v349
  %v558 = vpop.f32.mrb[0].mxu0
  %v559 = vadd.f32 %v394, %v558
  %v560 = vpop.f32.mrb[0].mxu0
  %v561 = vpop.f32.mrb[0].mxu0
  %v562 = vadd.f32 %v394, %v561
  %v563 = vpop.f32.mrb[0].mxu0
  %564 = vmatprep.mubr.bf16.mxu0 %v352
  %565 = vmatmul.mubr.bf16.gmra.mrb[0].mxu0 %v351
  %v566 = vpop.f32.mrb[0].mxu0
  %v567 = vadd.f32 %v394, %v566
  %v568 = vpop.f32.mrb[0].mxu0
  %v569 = vpop.f32.mrb[0].mxu0
  %v570 = vadd.f32 %v394, %v569
  %v571 = vpop.f32.mrb[0].mxu0
  %572 = vmatprep.mubr.bf16.mxu0 %v354
  %573 = vmatmul.mubr.bf16.gmra.mrb[0].mxu0 %v353
  %v574 = vpop.f32.mrb[0].mxu0
  %v575 = vadd.f32 %v394, %v574
  %v576 = vpop.f32.mrb[0].mxu0
  %v577 = vpop.f32.mrb[0].mxu0
  %v578 = vadd.f32 %v394, %v577
  %v579 = vpop.f32.mrb[0].mxu0
  %580 = vmatprep.mubr.bf16.mxu0 %v356
  %581 = vmatmul.mubr.bf16.gmra.mrb[0].mxu0 %v355
  %v582 = vpop.f32.mrb[0].mxu0
  %v583 = vadd.f32 %v394, %v582
  %v584 = vpop.f32.mrb[0].mxu0
  %v585 = vpop.f32.mrb[0].mxu0
  %v586 = vadd.f32 %v394, %v585
  %v587 = vpop.f32.mrb[0].mxu0
  %588 = vdwg.mxu0
  %v589 = vmax.f32 %v527, 0.0
  %v590 = vmax.f32 %v530, 0.0
  %v591 = vmax.f32 %v535, 0.0
  %v592 = vmax.f32 %v538, 0.0
  %v593 = vmax.f32 %v543, 0.0
  %v594 = vmax.f32 %v546, 0.0
  %v595 = vmax.f32 %v551, 0.0
  %v596 = vmax.f32 %v554, 0.0
  %v597 = vmax.f32 %v559, 0.0
  %v598 = vmax.f32 %v562, 0.0
  %v599 = vmax.f32 %v567, 0.0
  %v600 = vmax.f32 %v570, 0.0
  %v601 = vmax.f32 %v575, 0.0
  %v602 = vmax.f32 %v578, 0.0
  %v603 = vmax.f32 %v583, 0.0
  %v604 = vmax.f32 %v586, 0.0
  %v605 = vpack.c.bf16 %v590, %v589
  %v606 = vpack.c.bf16 %v592, %v591
  %v607 = vpack.c.bf16 %v594, %v593
  %v608 = vpack.c.bf16 %v596, %v595
  %v609 = vpack.c.bf16 %v598, %v597
  %v610 = vpack.c.bf16 %v600, %v599
  %v611 = vpack.c.bf16 %v602, %v601
  %v612 = vpack.c.bf16 %v604, %v603
  %v613 = vld [vmem:[%s3] sm:$0xf]
  %v614 = vld [vmem:[%s3 + $0x4] sm:$0xf]
  %v615 = vld [vmem:[%s3 + $0x8] sm:$0xf]
  %v616 = vld [vmem:[%s3 + $0xc] sm:$0xf]
  %v617 = vld [vmem:[%s3 + $0x10] sm:$0xf]
  %v618 = vld [vmem:[%s3 + $0x14] sm:$0xf]
  %v619 = vld [vmem:[%s3 + $0x18] sm:$0xf]
  %v620 = vld [vmem:[%s3 + $0x1c] sm:$0xf]
  %v621 = vld [vmem:[%s3 + $0x20] sm:$0xf]
  %v622 = vld [vmem:[%s3 + $0x24] sm:$0xf]
  %v623 = vld [vmem:[%s3 + $0x28] sm:$0xf]
  %v624 = vld [vmem:[%s3 + $0x2c] sm:$0xf]
  %v625 = vld [vmem:[%s3 + $0x30] sm:$0xf]
  %v626 = vld [vmem:[%s3 + $0x34] sm:$0xf]
  %v627 = vld [vmem:[%s3 + $0x38] sm:$0xf]
  %v628 = vld [vmem:[%s3 + $0x3c] sm:$0xf]
  %v629 = vld [vmem:[%s5 + $0x3] sm:$0x1]
  %v631 = vlaneseq
  %v632 = vshrl.u32 %v631, 7
  %v633 = vsub.s32 0, %v632
  %v634 = vrot.slane %v629, %v633
  %v652 = vunpack.c.l.b16 %v613
  %v653 = vunpack.c.l.b16 %v614
  %v654 = vunpack.c.l.b16 %v615
  %v655 = vunpack.c.l.b16 %v616
  %v656 = vunpack.c.l.b16 %v617
  %v657 = vunpack.c.l.b16 %v618
  %v658 = vunpack.c.l.b16 %v619
  %v659 = vunpack.c.l.b16 %v620
  %v660 = vunpack.c.l.b16 %v621
  %v661 = vunpack.c.l.b16 %v622
  %v662 = vunpack.c.l.b16 %v623
  %v663 = vunpack.c.l.b16 %v624
  %v664 = vunpack.c.l.b16 %v625
  %v665 = vunpack.c.l.b16 %v626
  %v666 = vunpack.c.l.b16 %v627
  %v667 = vunpack.c.l.b16 %v628
  %v668 = vpack.c.b16 %v653, %v652
  %v669 = vpack.c.b16 %v655, %v654
  %v670 = vpack.c.b16 %v657, %v656
  %v671 = vpack.c.b16 %v659, %v658
  %v672 = vpack.c.b16 %v661, %v660
  %v673 = vpack.c.b16 %v663, %v662
  %v674 = vpack.c.b16 %v665, %v664
  %v675 = vpack.c.b16 %v667, %v666
  %684 = vmatprep.subr.bf16.mxu0 0
  %685 = vmatpush1.bf16.msra.mxu0 %v668
  %686 = vmatprep.subr.bf16.mxu0 0
  %687 = vmatpush1.bf16.msra.mxu0 %v669
  %688 = vmatprep.subr.bf16.mxu0 0
  %689 = vmatpush1.bf16.msra.mxu0 %v670
  %690 = vmatprep.subr.bf16.mxu0 0
  %691 = vmatpush1.bf16.msra.mxu0 %v671
  %692 = vmatprep.subr.bf16.mxu0 0
  %693 = vmatpush1.bf16.msra.mxu0 %v672
  %694 = vmatprep.subr.bf16.mxu0 0
  %695 = vmatpush1.bf16.msra.mxu0 %v673
  %696 = vmatprep.subr.bf16.mxu0 0
  %697 = vmatpush1.bf16.msra.mxu0 %v674
  %698 = vmatprep.subr.bf16.mxu0 0
  %699 = vmatpush1.bf16.msra.mxu0 %v675
  %700 = vmatprep.subr.bf16.mxu0 0
  %701 = vmatpush1.bf16.msra.mxu0 0
  %702 = vmatprep.subr.bf16.mxu0 0
  %703 = vmatpush1.bf16.msra.mxu0 0
  %704 = vmatprep.subr.bf16.mxu0 0
  %705 = vmatpush1.bf16.msra.mxu0 0
  %706 = vmatprep.subr.bf16.mxu0 0
  %707 = vmatpush1.bf16.msra.mxu0 0
  %708 = vmatprep.subr.bf16.mxu0 0
  %709 = vmatpush1.bf16.msra.mxu0 0
  %710 = vmatprep.subr.bf16.mxu0 0
  %711 = vmatpush1.bf16.msra.mxu0 0
  %712 = vmatprep.subr.bf16.mxu0 0
  %713 = vmatpush1.bf16.msra.mxu0 0
  %714 = vmatprep.subr.bf16.mxu0 0
  %715 = vmatpush1.bf16.msra.mxu0 0
  %716 = vmatprep.mubr.bf16.mxu0 0
  %717 = vmatmul.mubr.bf16.gmra.mrb[0].mxu0 %v605
  %v718 = vpop.f32.mrb[0].mxu0
  %v719 = vadd.f32 %v634, %v718
  %v720 = vpop.f32.mrb[0].mxu0
  %v721 = vpop.f32.mrb[0].mxu0
  %v722 = vadd.f32 %v634, %v721
  %v723 = vpop.f32.mrb[0].mxu0
  %724 = vmatprep.mubr.bf16.mxu0 0
  %725 = vmatmul.mubr.bf16.gmra.mrb[0].mxu0 %v606
  %v726 = vpop.f32.mrb[0].mxu0
  %v727 = vadd.f32 %v634, %v726
  %v728 = vpop.f32.mrb[0].mxu0
  %v729 = vpop.f32.mrb[0].mxu0
  %v730 = vadd.f32 %v634, %v729
  %v731 = vpop.f32.mrb[0].mxu0
  %732 = vmatprep.mubr.bf16.mxu0 0
  %733 = vmatmul.mubr.bf16.gmra.mrb[0].mxu0 %v607
  %v734 = vpop.f32.mrb[0].mxu0
  %v735 = vadd.f32 %v634, %v734
  %v736 = vpop.f32.mrb[0].mxu0
  %v737 = vpop.f32.mrb[0].mxu0
  %v738 = vadd.f32 %v634, %v737
  %v739 = vpop.f32.mrb[0].mxu0
  %740 = vmatprep.mubr.bf16.mxu0 0
  %741 = vmatmul.mubr.bf16.gmra.mrb[0].mxu0 %v608
  %v742 = vpop.f32.mrb[0].mxu0
  %v743 = vadd.f32 %v634, %v742
  %v744 = vpop.f32.mrb[0].mxu0
  %v745 = vpop.f32.mrb[0].mxu0
  %v746 = vadd.f32 %v634, %v745
  %v747 = vpop.f32.mrb[0].mxu0
  %748 = vmatprep.mubr.bf16.mxu0 0
  %749 = vmatmul.mubr.bf16.gmra.mrb[0].mxu0 %v609
  %v750 = vpop.f32.mrb[0].mxu0
  %v751 = vadd.f32 %v634, %v750
  %v752 = vpop.f32.mrb[0].mxu0
  %v753 = vpop.f32.mrb[0].mxu0
  %v754 = vadd.f32 %v634, %v753
  %v755 = vpop.f32.mrb[0].mxu0
  %756 = vmatprep.mubr.bf16.mxu0 0
  %757 = vmatmul.mubr.bf16.gmra.mrb[0].mxu0 %v610
  %v758 = vpop.f32.mrb[0].mxu0
  %v759 = vadd.f32 %v634, %v758
  %v760 = vpop.f32.mrb[0].mxu0
  %v761 = vpop.f32.mrb[0].mxu0
  %v762 = vadd.f32 %v634, %v761
  %v763 = vpop.f32.mrb[0].mxu0
  %764 = vmatprep.mubr.bf16.mxu0 0
  %765 = vmatmul.mubr.bf16.gmra.mrb[0].mxu0 %v611
  %v766 = vpop.f32.mrb[0].mxu0
  %v767 = vadd.f32 %v634, %v766
  %v768 = vpop.f32.mrb[0].mxu0
  %v769 = vpop.f32.mrb[0].mxu0
  %v770 = vadd.f32 %v634, %v769
  %v771 = vpop.f32.mrb[0].mxu0
  %772 = vmatprep.mubr.bf16.mxu0 0
  %773 = vmatmul.mubr.bf16.gmra.mrb[0].mxu0 %v612
  %v774 = vpop.f32.mrb[0].mxu0
  %v775 = vadd.f32 %v634, %v774
  %v776 = vpop.f32.mrb[0].mxu0
  %v777 = vpop.f32.mrb[0].mxu0
  %v778 = vadd.f32 %v634, %v777
  %v779 = vpop.f32.mrb[0].mxu0
  %780 = vdwg.mxu0
  %v781 = vmax.f32 %v719, 0.0
  %v782 = vmax.f32 %v722, 0.0
  %v783 = vmax.f32 %v727, 0.0
  %v784 = vmax.f32 %v730, 0.0
  %v785 = vmax.f32 %v735, 0.0
  %v786 = vmax.f32 %v738, 0.0
  %v787 = vmax.f32 %v743, 0.0
  %v788 = vmax.f32 %v746, 0.0
  %v789 = vmax.f32 %v751, 0.0
  %v790 = vmax.f32 %v754, 0.0
  %v791 = vmax.f32 %v759, 0.0
  %v792 = vmax.f32 %v762, 0.0
  %v793 = vmax.f32 %v767, 0.0
  %v794 = vmax.f32 %v770, 0.0
  %v795 = vmax.f32 %v775, 0.0
  %v796 = vmax.f32 %v778, 0.0
  %v797 = vpack.c.bf16 %v782, %v781
  %v798 = vpack.c.bf16 %v784, %v783
  %v799 = vpack.c.bf16 %v786, %v785
  %v800 = vpack.c.bf16 %v788, %v787
  %v801 = vpack.c.bf16 %v790, %v789
  %v802 = vpack.c.bf16 %v792, %v791
  %v803 = vpack.c.bf16 %v794, %v793
  %v804 = vpack.c.bf16 %v796, %v795
  %v805 = vld [vmem:[%s4] sm:$0xf]
  %v806 = vld [vmem:[%s4 + $0x4] sm:$0xf]
  %v807 = vld [vmem:[%s4 + $0x8] sm:$0xf]
  %v808 = vld [vmem:[%s4 + $0xc] sm:$0xf]
  %v809 = vld [vmem:[%s4 + $0x10] sm:$0xf]
  %v810 = vld [vmem:[%s4 + $0x14] sm:$0xf]
  %v811 = vld [vmem:[%s4 + $0x18] sm:$0xf]
  %v812 = vld [vmem:[%s4 + $0x1c] sm:$0xf]
  %v813 = vld [vmem:[%s4 + $0x20] sm:$0xf]
  %v814 = vld [vmem:[%s4 + $0x24] sm:$0xf]
  %v815 = vld [vmem:[%s4 + $0x28] sm:$0xf]
  %v816 = vld [vmem:[%s4 + $0x2c] sm:$0xf]
  %v817 = vld [vmem:[%s4 + $0x30] sm:$0xf]
  %v818 = vld [vmem:[%s4 + $0x34] sm:$0xf]
  %v819 = vld [vmem:[%s4 + $0x38] sm:$0xf]
  %v820 = vld [vmem:[%s4 + $0x3c] sm:$0xf]
  %v821 = vld [vmem:[%s5 + $0x4] sm:$0x1]
  %v823 = vlaneseq
  %v824 = vshrl.u32 %v823, 7
  %v825 = vsub.s32 0, %v824
  %v826 = vrot.slane %v821, %v825
  %v844 = vunpack.c.l.b16 %v805
  %v845 = vunpack.c.l.b16 %v806
  %v846 = vunpack.c.l.b16 %v807
  %v847 = vunpack.c.l.b16 %v808
  %v848 = vunpack.c.l.b16 %v809
  %v849 = vunpack.c.l.b16 %v810
  %v850 = vunpack.c.l.b16 %v811
  %v851 = vunpack.c.l.b16 %v812
  %v852 = vunpack.c.l.b16 %v813
  %v853 = vunpack.c.l.b16 %v814
  %v854 = vunpack.c.l.b16 %v815
  %v855 = vunpack.c.l.b16 %v816
  %v856 = vunpack.c.l.b16 %v817
  %v857 = vunpack.c.l.b16 %v818
  %v858 = vunpack.c.l.b16 %v819
  %v859 = vunpack.c.l.b16 %v820
  %v860 = vpack.c.b16 %v845, %v844
  %v861 = vpack.c.b16 %v847, %v846
  %v862 = vpack.c.b16 %v849, %v848
  %v863 = vpack.c.b16 %v851, %v850
  %v864 = vpack.c.b16 %v853, %v852
  %v865 = vpack.c.b16 %v855, %v854
  %v866 = vpack.c.b16 %v857, %v856
  %v867 = vpack.c.b16 %v859, %v858
  %876 = vmatprep.subr.bf16.mxu0 0
  %877 = vmatpush1.bf16.msra.mxu0 %v860
  %878 = vmatprep.subr.bf16.mxu0 0
  %879 = vmatpush1.bf16.msra.mxu0 %v861
  %880 = vmatprep.subr.bf16.mxu0 0
  %881 = vmatpush1.bf16.msra.mxu0 %v862
  %882 = vmatprep.subr.bf16.mxu0 0
  %883 = vmatpush1.bf16.msra.mxu0 %v863
  %884 = vmatprep.subr.bf16.mxu0 0
  %885 = vmatpush1.bf16.msra.mxu0 %v864
  %886 = vmatprep.subr.bf16.mxu0 0
  %887 = vmatpush1.bf16.msra.mxu0 %v865
  %888 = vmatprep.subr.bf16.mxu0 0
  %889 = vmatpush1.bf16.msra.mxu0 %v866
  %890 = vmatprep.subr.bf16.mxu0 0
  %891 = vmatpush1.bf16.msra.mxu0 %v867
  %892 = vmatprep.subr.bf16.mxu0 0
  %893 = vmatpush1.bf16.msra.mxu0 0
  %894 = vmatprep.subr.bf16.mxu0 0
  %895 = vmatpush1.bf16.msra.mxu0 0
  %896 = vmatprep.subr.bf16.mxu0 0
  %897 = vmatpush1.bf16.msra.mxu0 0
  %898 = vmatprep.subr.bf16.mxu0 0
  %899 = vmatpush1.bf16.msra.mxu0 0
  %900 = vmatprep.subr.bf16.mxu0 0
  %901 = vmatpush1.bf16.msra.mxu0 0
  %902 = vmatprep.subr.bf16.mxu0 0
  %903 = vmatpush1.bf16.msra.mxu0 0
  %904 = vmatprep.subr.bf16.mxu0 0
  %905 = vmatpush1.bf16.msra.mxu0 0
  %906 = vmatprep.subr.bf16.mxu0 0
  %907 = vmatpush1.bf16.msra.mxu0 0
  %908 = vmatprep.mubr.bf16.mxu0 0
  %909 = vmatmul.mubr.bf16.gmra.mrb[0].mxu0 %v797
  %v910 = vpop.f32.mrb[0].mxu0
  %v911 = vadd.f32 %v826, %v910
  %v912 = vpop.f32.mrb[0].mxu0
  %v913 = vpop.f32.mrb[0].mxu0
  %v914 = vadd.f32 %v826, %v913
  %v915 = vpop.f32.mrb[0].mxu0
  %916 = vmatprep.mubr.bf16.mxu0 0
  %917 = vmatmul.mubr.bf16.gmra.mrb[0].mxu0 %v798
  %v918 = vpop.f32.mrb[0].mxu0
  %v919 = vadd.f32 %v826, %v918
  %v920 = vpop.f32.mrb[0].mxu0
  %v921 = vpop.f32.mrb[0].mxu0
  %v922 = vadd.f32 %v826, %v921
  %v923 = vpop.f32.mrb[0].mxu0
  %924 = vmatprep.mubr.bf16.mxu0 0
  %925 = vmatmul.mubr.bf16.gmra.mrb[0].mxu0 %v799
  %v926 = vpop.f32.mrb[0].mxu0
  %v927 = vadd.f32 %v826, %v926
  %v928 = vpop.f32.mrb[0].mxu0
  %v929 = vpop.f32.mrb[0].mxu0
  %v930 = vadd.f32 %v826, %v929
  %v931 = vpop.f32.mrb[0].mxu0
  %932 = vmatprep.mubr.bf16.mxu0 0
  %933 = vmatmul.mubr.bf16.gmra.mrb[0].mxu0 %v800
  %v934 = vpop.f32.mrb[0].mxu0
  %v935 = vadd.f32 %v826, %v934
  %v936 = vpop.f32.mrb[0].mxu0
  %v937 = vpop.f32.mrb[0].mxu0
  %v938 = vadd.f32 %v826, %v937
  %v939 = vpop.f32.mrb[0].mxu0
  %940 = vmatprep.mubr.bf16.mxu0 0
  %941 = vmatmul.mubr.bf16.gmra.mrb[0].mxu0 %v801
  %v942 = vpop.f32.mrb[0].mxu0
  %v943 = vadd.f32 %v826, %v942
  %v944 = vpop.f32.mrb[0].mxu0
  %v945 = vpop.f32.mrb[0].mxu0
  %v946 = vadd.f32 %v826, %v945
  %v947 = vpop.f32.mrb[0].mxu0
  %948 = vmatprep.mubr.bf16.mxu0 0
  %949 = vmatmul.mubr.bf16.gmra.mrb[0].mxu0 %v802
  %v950 = vpop.f32.mrb[0].mxu0
  %v951 = vadd.f32 %v826, %v950
  %v952 = vpop.f32.mrb[0].mxu0
  %v953 = vpop.f32.mrb[0].mxu0
  %v954 = vadd.f32 %v826, %v953
  %v955 = vpop.f32.mrb[0].mxu0
  %956 = vmatprep.mubr.bf16.mxu0 0
  %957 = vmatmul.mubr.bf16.gmra.mrb[0].mxu0 %v803
  %v958 = vpop.f32.mrb[0].mxu0
  %v959 = vadd.f32 %v826, %v958
  %v960 = vpop.f32.mrb[0].mxu0
  %v961 = vpop.f32.mrb[0].mxu0
  %v962 = vadd.f32 %v826, %v961
  %v963 = vpop.f32.mrb[0].mxu0
  %964 = vmatprep.mubr.bf16.mxu0 0
  %965 = vmatmul.mubr.bf16.gmra.mrb[0].mxu0 %v804
  %v966 = vpop.f32.mrb[0].mxu0
  %v967 = vadd.f32 %v826, %v966
  %v968 = vpop.f32.mrb[0].mxu0
  %v969 = vpop.f32.mrb[0].mxu0
  %v970 = vadd.f32 %v826, %v969
  %v971 = vpop.f32.mrb[0].mxu0
  %972 = vdwg.mxu0
  %973 = vst [vmem:[%s6] sm:$0xff] %v911
  %974 = vst [vmem:[%s6 + $0x8] sm:$0xff] %v914
  %975 = vst [vmem:[%s6 + $0x10] sm:$0xff] %v919
  %976 = vst [vmem:[%s6 + $0x18] sm:$0xff] %v922
  %977 = vst [vmem:[%s6 + $0x20] sm:$0xff] %v927
  %978 = vst [vmem:[%s6 + $0x28] sm:$0xff] %v930
  %979 = vst [vmem:[%s6 + $0x30] sm:$0xff] %v935
  %980 = vst [vmem:[%s6 + $0x38] sm:$0xff] %v938
  %981 = vst [vmem:[%s6 + $0x40] sm:$0xff] %v943
  %982 = vst [vmem:[%s6 + $0x48] sm:$0xff] %v946
  %983 = vst [vmem:[%s6 + $0x50] sm:$0xff] %v951
  %984 = vst [vmem:[%s6 + $0x58] sm:$0xff] %v954
  %985 = vst [vmem:[%s6 + $0x60] sm:$0xff] %v959
  %986 = vst [vmem:[%s6 + $0x68] sm:$0xff] %v962
  %987 = vst [vmem:[%s6 + $0x70] sm:$0xff] %v967
  %988 = vst [vmem:[%s6 + $0x78] sm:$0xff] %v970
  // Predicated region
  $region26: #{dqn_forward.1} parent=0 // pred_check
    _
  $region27: #{dqn_forward.1} parent=0 // pred_check_branch
    %990 = sbr.rel (0) target = $region29
  $region28: #{dqn_forward.1} parent=0 // pred_region
    _
  $region29: #{dqn_forward.1} parent=0 // pred_fallthru
    _
  // Predicated region
  $region30: #{dqn_forward.1} parent=0 // pred_check
    _
  $region31: #{dqn_forward.1} parent=0 // pred_check_branch
    %992 = sbr.rel (0) target = $region33
  $region32: #{dqn_forward.1} parent=0 // pred_region
    _
  $region33: #{dqn_forward.1} parent=0 // pred_fallthru
    _

</llo_original>
